<compile_context>
chip_gen: v5e
topology: v5e:2x2
jax: 0.10.0
libtpu: 0.0.40
codegen_flags: <defaults>
</compile_context>

<pallas_src>
import functools
import math

import jax
import jax.numpy as jnp
from jax.experimental import pallas as pl
from jax.experimental.pallas import tpu as pltpu

_LANE = 128          # TPU vreg lane width
_BF16_SUBLANE = 16   # bf16 packs (16, 128) per vreg
_TB_MAX = 512        # max batch tile (512-1024 amortizes per-step overhead)


def _round_up(n, m):
    return ((n + m - 1) // m) * m


def _cdiv(a, b):
    return -(-a // b)


def _mlp_kernel(x_ref, w1_ref, b1_ref, w2_ref, b2_ref, w3_ref, b3_ref, o_ref):
    """[Linear+ReLU, Linear+ReLU, Linear].

    The static cifar task-window mask is pre-folded into (w3, b3) by
    prepare_params(), so there is no mask epilogue here. MXU operands are
    bf16; accumulation, bias add and ReLU stay f32.
    """
    h = jnp.dot(x_ref[...], w1_ref[...],
                preferred_element_type=jnp.float32) + b1_ref[...]
    h = jnp.maximum(h, 0.0)

    h = jnp.dot(h.astype(w2_ref.dtype), w2_ref[...],
                preferred_element_type=jnp.float32) + b2_ref[...]
    h = jnp.maximum(h, 0.0)

    o_ref[...] = jnp.dot(h.astype(w3_ref.dtype), w3_ref[...],
                         preferred_element_type=jnp.float32) + b3_ref[...]


def prepare_params(params, n_inputs, n_outputs, t, nc_per_task, *,
                   is_cifar=True, compute_dtype=jnp.bfloat16):
    """One-time (per params / task-id) prep, hoisted out of the hot path.

    * Lane-dense zero padding: n_inputs / n_hiddens / n_outputs -> x128.
    * bf16 cast of the matmul operands (weights); biases stay f32.
    * Task mask folded into the output layer: masked w3 columns -> 0,
      masked b3 entries -> -1e11, so masked logits come out exactly -1e11.
      Changing t only re-runs this cheap prep, never recompiles the kernel.
    """
    w1, b1, w2, b2, w3, b3 = params
    nh = w1.shape[1]

    if is_cifar:
        offset1 = int(t) * int(nc_per_task)
        offset2 = (int(t) + 1) * int(nc_per_task)
    else:
        offset1, offset2 = 0, int(n_outputs)

    NI = _round_up(int(n_inputs), _LANE)
    NH = _round_up(int(nh), _LANE)
    NO = _round_up(int(n_outputs), _LANE)

    def pad2(a, rows, cols):
        return jnp.pad(a, ((0, rows - a.shape[0]), (0, cols - a.shape[1])))

    col = jnp.arange(n_outputs)[None, :]
    keep = (col >= offset1) & (col < offset2)
    w3m = jnp.where(keep, w3, 0.0)                     # masked cols contribute 0
    b3m = jnp.where(keep, b3, jnp.float32(-1.0e11))    # so logit == -1e11 exactly

    prepped = (
        pad2(w1, NI, NH).astype(compute_dtype),
        pad2(b1, 1, NH).astype(jnp.float32),
        pad2(w2, NH, NH).astype(compute_dtype),
        pad2(b2, 1, NH).astype(jnp.float32),
        pad2(w3m, NH, NO).astype(compute_dtype),
        pad2(b3m, 1, NO).astype(jnp.float32),
    )
    # Materialize now so none of this runs per forward call.
    return jax.tree_util.tree_map(
        lambda a: jax.block_until_ready(jax.device_put(a)), prepped)


@functools.partial(jax.jit, static_argnames=("n_outputs",))
def net_forward(x, prepped, n_outputs):
    """Per-call hot path: pad x lane/sublane-dense, one pallas_call, slice."""
    w1p, b1p, w2p, b2p, w3p, b3p = prepped
    B, n_in = x.shape
    NI, NH = w1p.shape
    NO = w3p.shape[1]
    compute_dtype = w1p.dtype

    # Batch tiling: multiple of 16 (bf16 packing), TB <= _TB_MAX; keep the grid
    # length even when >1 step so both v7x TensorCores stay busy.
    B16 = _round_up(B, _BF16_SUBLANE)
    steps = _cdiv(B16, _TB_MAX)
    if steps > 1 and steps % 2:
        steps += 1
    TB = _round_up(_cdiv(B16, steps), _BF16_SUBLANE)
    steps = _cdiv(B16, TB)
    Bp = steps * TB

    xp = jnp.pad(x, ((0, Bp - B), (0, NI - n_in))).astype(compute_dtype)

    # Weights stay VMEM-resident across all batch tiles (constant index_map).
    def resident(shape):
        kwargs = {}
        if NH >= 1024:
            # Single-buffer large resident weights so 2x pipeline buffering
            # does not blow v7x's 64 MiB VMEM (no-op at small NH).
            kwargs["pipeline_mode"] = pl.Buffered(1)
        return pl.BlockSpec(shape, lambda i: (0, 0), **kwargs)

    # Explicit scoped-VMEM sizing (defaults are 16-32 MiB): 2x for pipeline
    # double-buffering + headroom, capped at v7x's 64 MiB physical VMEM.
    def nbytes(shape, dtype):
        return math.prod(shape) * jnp.dtype(dtype).itemsize

    vmem_need = 2 * (
        nbytes((TB, NI), compute_dtype) + nbytes((TB, NO), jnp.float32)
        + nbytes((NI, NH), compute_dtype) + nbytes((NH, NH), compute_dtype)
        + nbytes((NH, NO), compute_dtype)
        + 2 * nbytes((1, NH), jnp.float32) + nbytes((1, NO), jnp.float32))
    vmem_limit = int(max(min(vmem_need + (8 << 20), 64 << 20), 16 << 20))

    out = pl.pallas_call(
        _mlp_kernel,
        out_shape=jax.ShapeDtypeStruct((Bp, NO), jnp.float32),
        grid_spec=pltpu.PrefetchScalarGridSpec(
            num_scalar_prefetch=0,
            grid=(steps,),
            in_specs=[
                pl.BlockSpec((TB, NI), lambda i: (i, 0)),   # x: tiled on batch
                resident((NI, NH)), resident((1, NH)),      # w1, b1
                resident((NH, NH)), resident((1, NH)),      # w2, b2
                resident((NH, NO)), resident((1, NO)),      # w3, b3
            ],
            out_specs=pl.BlockSpec((TB, NO), lambda i: (i, 0)),
        ),
        compiler_params=pltpu.CompilerParams(
            dimension_semantics=("parallel",),   # megacore across batch tiles
            vmem_limit_bytes=vmem_limit),
    )(xp, w1p, b1p, w2p, b2p, w3p, b3p)

    # Slice away batch padding and lane padding of the output dim.
    # TODO(synk): emit bf16 logits if downstream tolerates it (halves output
    # writeback); kept f32 to match the PyTorch reference dtype.
    return out[:B, :n_outputs]


def init_params(key, n_inputs, n_hiddens, n_outputs):
    """Deterministic init of the Learner MLP: 2 hidden layers + output layer."""
    ks = jax.random.split(key, 6)
    s = 0.1
    w1 = jax.random.normal(ks[0], (n_inputs, n_hiddens), jnp.float32) * s
    b1 = jax.random.normal(ks[1], (1, n_hiddens), jnp.float32) * s
    w2 = jax.random.normal(ks[2], (n_hiddens, n_hiddens), jnp.float32) * s
    b2 = jax.random.normal(ks[3], (1, n_hiddens), jnp.float32) * s
    w3 = jax.random.normal(ks[4], (n_hiddens, n_outputs), jnp.float32) * s
    b3 = jax.random.normal(ks[5], (1, n_outputs), jnp.float32) * s
    return (w1, b1, w2, b2, w3, b3)


if __name__ == "__main__":
    # small shapes consistent with the module: n_layers=2, n_hiddens=32,
    # n_inputs=32, n_outputs=20, n_tasks=4 (cifar-style task masking), batch=8
    n_inputs, n_hiddens, n_outputs, n_tasks = 32, 32, 20, 4
    batch = 8
    t = 1
    nc_per_task = n_outputs // n_tasks

    key = jax.random.PRNGKey(0)
    kx, kp = jax.random.split(key)
    x = jax.random.normal(kx, (batch, n_inputs), jnp.float32)
    params = init_params(kp, n_inputs, n_hiddens, n_outputs)

    # TODO(synk): BGD weight randomization (randomize_weights with std>0),
    # reservoir replay memory and the meta-learning/observe machinery are
    # training-time host logic, not part of the forward hot path; forward uses
    # mean weights (force_std=0).

    # One-time prep (per params / task id), hoisted out of the hot path.
    prepped = prepare_params(params, n_inputs, n_outputs, t, nc_per_task,
                             is_cifar=True)

    out = net_forward(x, prepped, n_outputs)
    out = jax.block_until_ready(out)

    # lightweight sanity check against plain JAX reference (f32); tolerance
    # accounts for bf16 matmul operands in the kernel.
    w1, b1, w2, b2, w3, b3 = params
    h = jnp.maximum(x @ w1 + b1, 0.0)
    h = jnp.maximum(h @ w2 + b2, 0.0)
    ref = h @ w3 + b3
    col = jnp.arange(n_outputs)[None, :]
    keep = (col >= t * nc_per_task) & (col < (t + 1) * nc_per_task)
    ref = jnp.where(keep, ref, -1.0e11)
    assert out.shape == (batch, n_outputs)
    assert jnp.allclose(out, ref, atol=5e-2, rtol=5e-2)

    print("KERNEL_OK")
</pallas_src>

<mosaic_0001>
module attributes {stable_mosaic.version = 11 : i64} {
  func.func @_mlp_kernel(%arg0: i32, %arg1: memref<16x128xbf16, #tpu.memory_space<vmem>>, %arg2: memref<128x128xbf16, #tpu.memory_space<vmem>>, %arg3: memref<1x128xf32, #tpu.memory_space<vmem>>, %arg4: memref<128x128xbf16, #tpu.memory_space<vmem>>, %arg5: memref<1x128xf32, #tpu.memory_space<vmem>>, %arg6: memref<128x128xbf16, #tpu.memory_space<vmem>>, %arg7: memref<1x128xf32, #tpu.memory_space<vmem>>, %arg8: memref<16x128xf32, #tpu.memory_space<vmem>>) attributes {dimension_semantics = [#tpu.dimension_semantics<parallel>], iteration_bounds = array<i64: 1>, scalar_prefetch = 0 : i64, scratch_operands = 0 : i64, tpu.core_type = #tpu.core_type<tc>, window_params = [{transform_indices = @transform_0, window_bounds = array<i64: 16, 128>}, {pipeline_mode = #tpu.pipeline_mode<synchronous>, transform_indices = @transform_1, window_bounds = array<i64: 128, 128>}, {pipeline_mode = #tpu.pipeline_mode<synchronous>, transform_indices = @transform_2, window_bounds = array<i64: 1, 128>}, {pipeline_mode = #tpu.pipeline_mode<synchronous>, transform_indices = @transform_3, window_bounds = array<i64: 128, 128>}, {pipeline_mode = #tpu.pipeline_mode<synchronous>, transform_indices = @transform_4, window_bounds = array<i64: 1, 128>}, {pipeline_mode = #tpu.pipeline_mode<synchronous>, transform_indices = @transform_5, window_bounds = array<i64: 128, 128>}, {pipeline_mode = #tpu.pipeline_mode<synchronous>, transform_indices = @transform_6, window_bounds = array<i64: 1, 128>}, {transform_indices = @transform_7, window_bounds = array<i64: 16, 128>}]} {
    %c0 = arith.constant 0 : index
    %c0_0 = arith.constant 0 : index
    %0 = vector.load %arg1[%c0, %c0_0] : memref<16x128xbf16, #tpu.memory_space<vmem>>, vector<16x128xbf16>
    %c0_1 = arith.constant 0 : index
    %c0_2 = arith.constant 0 : index
    %1 = vector.load %arg2[%c0_1, %c0_2] : memref<128x128xbf16, #tpu.memory_space<vmem>>, vector<128x128xbf16>
    %cst = arith.constant dense<0.000000e+00> : vector<16x128xf32>
    %2 = tpu.matmul %0, %1, %cst {dimension_numbers = #tpu.dot_dimension_numbers<[1], [0], [0], [1], [0, 0, 1, 1], [], []>} : vector<16x128xbf16>, vector<128x128xbf16>, vector<16x128xf32> -> vector<16x128xf32>
    %c0_3 = arith.constant 0 : index
    %c0_4 = arith.constant 0 : index
    %3 = vector.load %arg3[%c0_3, %c0_4] : memref<1x128xf32, #tpu.memory_space<vmem>>, vector<1x128xf32>
    %4 = vector.broadcast %3 : vector<1x128xf32> to vector<16x128xf32>
    %5 = arith.addf %2, %4 : vector<16x128xf32>
    %cst_5 = arith.constant 0.000000e+00 : f32
    %6 = vector.broadcast %cst_5 : f32 to vector<16x128xf32>
    %7 = arith.maximumf %5, %6 : vector<16x128xf32>
    %8 = arith.truncf %7 : vector<16x128xf32> to vector<16x128xbf16>
    %c0_6 = arith.constant 0 : index
    %c0_7 = arith.constant 0 : index
    %9 = vector.load %arg4[%c0_6, %c0_7] : memref<128x128xbf16, #tpu.memory_space<vmem>>, vector<128x128xbf16>
    %cst_8 = arith.constant dense<0.000000e+00> : vector<16x128xf32>
    %10 = tpu.matmul %8, %9, %cst_8 {dimension_numbers = #tpu.dot_dimension_numbers<[1], [0], [0], [1], [0, 0, 1, 1], [], []>} : vector<16x128xbf16>, vector<128x128xbf16>, vector<16x128xf32> -> vector<16x128xf32>
    %c0_9 = arith.constant 0 : index
    %c0_10 = arith.constant 0 : index
    %11 = vector.load %arg5[%c0_9, %c0_10] : memref<1x128xf32, #tpu.memory_space<vmem>>, vector<1x128xf32>
    %12 = vector.broadcast %11 : vector<1x128xf32> to vector<16x128xf32>
    %13 = arith.addf %10, %12 : vector<16x128xf32>
    %cst_11 = arith.constant 0.000000e+00 : f32
    %14 = vector.broadcast %cst_11 : f32 to vector<16x128xf32>
    %15 = arith.maximumf %13, %14 : vector<16x128xf32>
    %16 = arith.truncf %15 : vector<16x128xf32> to vector<16x128xbf16>
    %c0_12 = arith.constant 0 : index
    %c0_13 = arith.constant 0 : index
    %17 = vector.load %arg6[%c0_12, %c0_13] : memref<128x128xbf16, #tpu.memory_space<vmem>>, vector<128x128xbf16>
    %cst_14 = arith.constant dense<0.000000e+00> : vector<16x128xf32>
    %18 = tpu.matmul %16, %17, %cst_14 {dimension_numbers = #tpu.dot_dimension_numbers<[1], [0], [0], [1], [0, 0, 1, 1], [], []>} : vector<16x128xbf16>, vector<128x128xbf16>, vector<16x128xf32> -> vector<16x128xf32>
    %c0_15 = arith.constant 0 : index
    %c0_16 = arith.constant 0 : index
    %19 = vector.load %arg7[%c0_15, %c0_16] : memref<1x128xf32, #tpu.memory_space<vmem>>, vector<1x128xf32>
    %20 = vector.broadcast %19 : vector<1x128xf32> to vector<16x128xf32>
    %21 = arith.addf %18, %20 : vector<16x128xf32>
    %c0_17 = arith.constant 0 : index
    %c0_18 = arith.constant 0 : index
    %22 = vector.load %arg8[%c0_17, %c0_18] : memref<16x128xf32, #tpu.memory_space<vmem>>, vector<16x128xf32>
    tpu.vector_store %arg8[%c0_17, %c0_18], %21 {strides = array<i32>} : memref<16x128xf32, #tpu.memory_space<vmem>>, vector<16x128xf32>,
    return
  }
  func.func @transform_0(%arg0: i32) -> (i32, i32) {
    %c0_i32 = arith.constant 0 : i32
    %c0_i32_0 = arith.constant 0 : i32
    return %arg0, %c0_i32 : i32, i32
  }
  func.func @transform_1(%arg0: i32) -> (i32, i32) {
    %c0_i32 = arith.constant 0 : i32
    %c0_i32_0 = arith.constant 0 : i32
    %c0_i32_1 = arith.constant 0 : i32
    return %c0_i32, %c0_i32_0 : i32, i32
  }
  func.func @transform_2(%arg0: i32) -> (i32, i32) {
    %c0_i32 = arith.constant 0 : i32
    %c0_i32_0 = arith.constant 0 : i32
    %c0_i32_1 = arith.constant 0 : i32
    return %c0_i32, %c0_i32_0 : i32, i32
  }
  func.func @transform_3(%arg0: i32) -> (i32, i32) {
    %c0_i32 = arith.constant 0 : i32
    %c0_i32_0 = arith.constant 0 : i32
    %c0_i32_1 = arith.constant 0 : i32
    return %c0_i32, %c0_i32_0 : i32, i32
  }
  func.func @transform_4(%arg0: i32) -> (i32, i32) {
    %c0_i32 = arith.constant 0 : i32
    %c0_i32_0 = arith.constant 0 : i32
    %c0_i32_1 = arith.constant 0 : i32
    return %c0_i32, %c0_i32_0 : i32, i32
  }
  func.func @transform_5(%arg0: i32) -> (i32, i32) {
    %c0_i32 = arith.constant 0 : i32
    %c0_i32_0 = arith.constant 0 : i32
    %c0_i32_1 = arith.constant 0 : i32
    return %c0_i32, %c0_i32_0 : i32, i32
  }
  func.func @transform_6(%arg0: i32) -> (i32, i32) {
    %c0_i32 = arith.constant 0 : i32
    %c0_i32_0 = arith.constant 0 : i32
    %c0_i32_1 = arith.constant 0 : i32
    return %c0_i32, %c0_i32_0 : i32, i32
  }
  func.func @transform_7(%arg0: i32) -> (i32, i32) {
    %c0_i32 = arith.constant 0 : i32
    %c0_i32_0 = arith.constant 0 : i32
    return %arg0, %c0_i32 : i32, i32
  }
}

</mosaic_0001>

<llo_original>
// kernel: net_forward.1
$region0: #{net_forward.1}
  #allocation0 [shape = 'u32[]', space=smem, size = 0x4, offset = 0x4, fixed_abs, tag = 'smem constant byte address 0x4 - core index']
  #allocation1 [shape = 'u32[72,128]{1,0:T(1,128)}', space=vmem, size = 0x9000, scoped, tag = 'internal scratch']
  %s0 = inlined_call_operand.vmem [shape: bf16[16,128], index: 0, kind: input, shape index: {}]
  %s1 = inlined_call_operand.hbm [shape: bf16[128,128], index: 1, kind: input, shape index: {}]
  %s2 = inlined_call_operand.vmem [shape: f32[1,128], index: 2, kind: input, shape index: {}]
  %s3 = inlined_call_operand.hbm [shape: bf16[128,128], index: 3, kind: input, shape index: {}]
  %s4 = inlined_call_operand.vmem [shape: f32[1,128], index: 4, kind: input, shape index: {}]
  %s5 = inlined_call_operand.hbm [shape: bf16[128,128], index: 5, kind: input, shape index: {}]
  %s6 = inlined_call_operand.vmem [shape: f32[1,128], index: 6, kind: input, shape index: {}]
  %s7 = inlined_call_operand.vmem [shape: f32[16,128], index: 7, kind: output, shape index: {}]
  %s8 = sld [smem:[#allocation0]]
  $region50: #{net_forward.1} parent=0
    _
  %s10 = ssub.s32 1, %s8
  %s11 = scalar_select 0, %s10, %s8
  $region1: #{net_forward.1} parent=0
    #allocation2 [shape = 'u8[32768]{0}', space=vmem, size = 0x8000, scoped, tag = 'input window, operand 1, single buffered']
    #allocation3 [shape = 's32[1]{0}', space=sflag, size = 0x4, scoped, tag = 'scoped memory for net_forward.1']
    #allocation4 [shape = 'u8[32768]{0}', space=vmem, size = 0x8000, scoped, tag = 'input window, operand 3, single buffered']
    #allocation5 [shape = 's32[1]{0}', space=sflag, size = 0x4, scoped, tag = 'scoped memory for net_forward.1']
    #allocation6 [shape = 'u8[32768]{0}', space=vmem, size = 0x8000, scoped, tag = 'input window, operand 5, single buffered']
    %12 = vsyncpa [#allocation3], 0
    %13 = vsyncpa [#allocation5], 0
    // Predicated region
    $region2: #{net_forward.1} parent=1 // pred_check
      _
    $region3: #{net_forward.1} parent=1 // pred_check_branch
      %15 = sbr.rel (0) target = $region5
    $region4: #{net_forward.1} parent=1 // pred_region
      _
    $region5: #{net_forward.1} parent=1 // pred_fallthru
      _
    // Predicated region
    $region6: #{net_forward.1} parent=1 // pred_check
      _
    $region7: #{net_forward.1} parent=1 // pred_check_branch
      %17 = sbr.rel (0) target = $region9
    $region8: #{net_forward.1} parent=1 // pred_region
      %19 = vsyncadd [#allocation3], 0
      %s20 = sshll.u32 %s1, 4
      %s21 = int_to_ptr.hbm [resolvable:$true] %s20
      %s22 = sshll.u32 [#allocation2], 4
      %s23 = int_to_ptr.vmem [resolvable:$true] %s22
      %28 = dma.hbm_to_vmem [thread:$0]  %s21, 1024, %s23, [#allocation3], 64, 64, 4
    $region9: #{net_forward.1} parent=1 // pred_fallthru
      _
    // Predicated region
    $region10: #{net_forward.1} parent=1 // pred_check
      _
    $region11: #{net_forward.1} parent=1 // pred_check_branch
      %30 = sbr.rel (0) target = $region13
    $region12: #{net_forward.1} parent=1 // pred_region
      _
    $region13: #{net_forward.1} parent=1 // pred_fallthru
      _
    // Predicated region
    $region14: #{net_forward.1} parent=1 // pred_check
      _
    $region15: #{net_forward.1} parent=1 // pred_check_branch
      %32 = sbr.rel (0) target = $region17
    $region16: #{net_forward.1} parent=1 // pred_region
      %34 = vsyncadd [#allocation5], 0
      %s35 = sshll.u32 %s3, 4
      %s36 = int_to_ptr.hbm [resolvable:$true] %s35
      %s37 = sshll.u32 [#allocation4], 4
      %s38 = int_to_ptr.vmem [resolvable:$true] %s37
      %43 = dma.hbm_to_vmem [thread:$0]  %s36, 1024, %s38, [#allocation5], 64, 64, 4
    $region17: #{net_forward.1} parent=1 // pred_fallthru
      _
    // Predicated region
    $region18: #{net_forward.1} parent=1 // pred_check
      _
    $region19: #{net_forward.1} parent=1 // pred_check_branch
      %45 = sbr.rel (0) target = $region21
    $region20: #{net_forward.1} parent=1 // pred_region
      _
    $region21: #{net_forward.1} parent=1 // pred_fallthru
      _
    // Predicated region
    $region22: #{net_forward.1} parent=1 // pred_check
      _
    $region23: #{net_forward.1} parent=1 // pred_check_branch
      %47 = sbr.rel (0) target = $region25
    $region24: #{net_forward.1} parent=1 // pred_region
      %49 = vsyncadd [#allocation5], 0
      %s50 = sshll.u32 %s5, 4
      %s51 = int_to_ptr.hbm [resolvable:$true] %s50
      %s52 = sshll.u32 [#allocation6], 4
      %s53 = int_to_ptr.vmem [resolvable:$true] %s52
      %58 = dma.hbm_to_vmem [thread:$0]  %s51, 1024, %s53, [#allocation5], 64, 64, 4
    $region25: #{net_forward.1} parent=1 // pred_fallthru
      _
    // Predicated region
    $region26: #{net_forward.1} parent=1 // pred_check
      _
    $region27: #{net_forward.1} parent=1 // pred_check_branch
      %60 = sbr.rel (0) target = $region29
    $region28: #{net_forward.1} parent=1 // pred_region
      _
    $region29: #{net_forward.1} parent=1 // pred_fallthru
      _
    // Predicated region
    $region30: #{net_forward.1} parent=1 // pred_check
      _
    $region31: #{net_forward.1} parent=1 // pred_check_branch
      %62 = sbr.rel (0) target = $region33
    $region32: #{net_forward.1} parent=1 // pred_region
      %64 = dma.done [#allocation3], 1024
    $region33: #{net_forward.1} parent=1 // pred_fallthru
      _
    // Predicated region
    $region34: #{net_forward.1} parent=1 // pred_check
      _
    $region35: #{net_forward.1} parent=1 // pred_check_branch
      %66 = sbr.rel (0) target = $region37
    $region36: #{net_forward.1} parent=1 // pred_region
      %68 = dma.done [#allocation5], 1024
    $region37: #{net_forward.1} parent=1 // pred_fallthru
      _
    // Predicated region
    $region38: #{net_forward.1} parent=1 // pred_check
      _
    $region39: #{net_forward.1} parent=1 // pred_check_branch
      %70 = sbr.rel (0) target = $region41
    $region40: #{net_forward.1} parent=1 // pred_region
      %72 = dma.done [#allocation5], 1024
    $region41: #{net_forward.1} parent=1 // pred_fallthru
      _
    %v73 = vld [vmem:[%s0] sm:$0xf]
    %v74 = vld [vmem:[%s0 + $0x4] sm:$0xf]
    %v75 = vld [vmem:[#allocation2] sm:$0xf]
    %v76 = vld [vmem:[#allocation2 + $0x4] sm:$0xf]
    %v77 = vld [vmem:[#allocation2 + $0x8] sm:$0xf]
    %v78 = vld [vmem:[#allocation2 + $0xc] sm:$0xf]
    %v79 = vld [vmem:[#allocation2 + $0x10] sm:$0xf]
    %v80 = vld [vmem:[#allocation2 + $0x14] sm:$0xf]
    %v81 = vld [vmem:[#allocation2 + $0x18] sm:$0xf]
    %v82 = vld [vmem:[#allocation2 + $0x1c] sm:$0xf]
    %v83 = vld [vmem:[#allocation2 + $0x20] sm:$0xf]
    %v84 = vld [vmem:[#allocation2 + $0x24] sm:$0xf]
    %v85 = vld [vmem:[#allocation2 + $0x28] sm:$0xf]
    %v86 = vld [vmem:[#allocation2 + $0x2c] sm:$0xf]
    %v87 = vld [vmem:[#allocation2 + $0x30] sm:$0xf]
    %v88 = vld [vmem:[#allocation2 + $0x34] sm:$0xf]
    %v89 = vld [vmem:[#allocation2 + $0x38] sm:$0xf]
    %v90 = vld [vmem:[#allocation2 + $0x3c] sm:$0xf]
    %v91 = vld [vmem:[%s2] sm:$0x1]
    %v93 = vperm.slane %v91, 0
    %v97 = vunpack.c.l.b16 %v73
    %v98 = vunpack.c.l.b16 %v74
    %v99 = vpack.c.b16 %v98, %v97
    %v117 = vunpack.c.l.b16 %v75
    %v118 = vunpack.c.l.b16 %v76
    %v119 = vunpack.c.l.b16 %v77
    %v120 = vunpack.c.l.b16 %v78
    %v121 = vunpack.c.l.b16 %v79
    %v122 = vunpack.c.l.b16 %v80
    %v123 = vunpack.c.l.b16 %v81
    %v124 = vunpack.c.l.b16 %v82
    %v125 = vunpack.c.l.b16 %v83
    %v126 = vunpack.c.l.b16 %v84
    %v127 = vunpack.c.l.b16 %v85
    %v128 = vunpack.c.l.b16 %v86
    %v129 = vunpack.c.l.b16 %v87
    %v130 = vunpack.c.l.b16 %v88
    %v131 = vunpack.c.l.b16 %v89
    %v132 = vunpack.c.l.b16 %v90
    %v133 = vpack.c.b16 %v118, %v117
    %v134 = vpack.c.b16 %v120, %v119
    %v135 = vpack.c.b16 %v122, %v121
    %v136 = vpack.c.b16 %v124, %v123
    %v137 = vpack.c.b16 %v126, %v125
    %v138 = vpack.c.b16 %v128, %v127
    %v139 = vpack.c.b16 %v130, %v129
    %v140 = vpack.c.b16 %v132, %v131
    %149 = vmatpush.bf16.msra.mxu0 %v140
    %150 = vmatpush.bf16.msra.mxu0 %v139
    %151 = vmatpush.bf16.msra.mxu0 %v138
    %152 = vmatpush.bf16.msra.mxu0 %v137
    %153 = vmatpush.bf16.msra.mxu0 %v136
    %154 = vmatpush.bf16.msra.mxu0 %v135
    %155 = vmatpush.bf16.msra.mxu0 %v134
    %156 = vmatpush.bf16.msra.mxu0 %v133
    %157 = vmatmul.bf16.gmra.mxu0 %v99
    %v158 = vpop.f32.mrf.mxu0
    %v159 = vadd.f32 %v93, %v158
    %v160 = vpop.f32.mrf.mxu0
    %v161 = vadd.f32 %v93, %v160
    %162 = vdwg.mxu0
    %v163 = vmax.f32 %v159, 0.0
    %v164 = vmax.f32 %v161, 0.0
    %v165 = vpack.c.bf16 %v164, %v163
    %v166 = vld [vmem:[#allocation4] sm:$0xf]
    %v167 = vld [vmem:[#allocation4 + $0x4] sm:$0xf]
    %v168 = vld [vmem:[#allocation4 + $0x8] sm:$0xf]
    %v169 = vld [vmem:[#allocation4 + $0xc] sm:$0xf]
    %v170 = vld [vmem:[#allocation4 + $0x10] sm:$0xf]
    %v171 = vld [vmem:[#allocation4 + $0x14] sm:$0xf]
    %v172 = vld [vmem:[#allocation4 + $0x18] sm:$0xf]
    %v173 = vld [vmem:[#allocation4 + $0x1c] sm:$0xf]
    %v174 = vld [vmem:[#allocation4 + $0x20] sm:$0xf]
    %v175 = vld [vmem:[#allocation4 + $0x24] sm:$0xf]
    %v176 = vld [vmem:[#allocation4 + $0x28] sm:$0xf]
    %v177 = vld [vmem:[#allocation4 + $0x2c] sm:$0xf]
    %v178 = vld [vmem:[#allocation4 + $0x30] sm:$0xf]
    %v179 = vld [vmem:[#allocation4 + $0x34] sm:$0xf]
    %v180 = vld [vmem:[#allocation4 + $0x38] sm:$0xf]
    %v181 = vld [vmem:[#allocation4 + $0x3c] sm:$0xf]
    %v182 = vld [vmem:[%s4] sm:$0x1]
    %v184 = vperm.slane %v182, 0
    %v202 = vunpack.c.l.b16 %v166
    %v203 = vunpack.c.l.b16 %v167
    %v204 = vunpack.c.l.b16 %v168
    %v205 = vunpack.c.l.b16 %v169
    %v206 = vunpack.c.l.b16 %v170
    %v207 = vunpack.c.l.b16 %v171
    %v208 = vunpack.c.l.b16 %v172
    %v209 = vunpack.c.l.b16 %v173
    %v210 = vunpack.c.l.b16 %v174
    %v211 = vunpack.c.l.b16 %v175
    %v212 = vunpack.c.l.b16 %v176
    %v213 = vunpack.c.l.b16 %v177
    %v214 = vunpack.c.l.b16 %v178
    %v215 = vunpack.c.l.b16 %v179
    %v216 = vunpack.c.l.b16 %v180
    %v217 = vunpack.c.l.b16 %v181
    %v218 = vpack.c.b16 %v203, %v202
    %v219 = vpack.c.b16 %v205, %v204
    %v220 = vpack.c.b16 %v207, %v206
    %v221 = vpack.c.b16 %v209, %v208
    %v222 = vpack.c.b16 %v211, %v210
    %v223 = vpack.c.b16 %v213, %v212
    %v224 = vpack.c.b16 %v215, %v214
    %v225 = vpack.c.b16 %v217, %v216
    %234 = vmatpush.bf16.msra.mxu0 %v225
    %235 = vmatpush.bf16.msra.mxu0 %v224
    %236 = vmatpush.bf16.msra.mxu0 %v223
    %237 = vmatpush.bf16.msra.mxu0 %v222
    %238 = vmatpush.bf16.msra.mxu0 %v221
    %239 = vmatpush.bf16.msra.mxu0 %v220
    %240 = vmatpush.bf16.msra.mxu0 %v219
    %241 = vmatpush.bf16.msra.mxu0 %v218
    %242 = vmatmul.bf16.gmra.mxu0 %v165
    %v243 = vpop.f32.mrf.mxu0
    %v244 = vadd.f32 %v184, %v243
    %v245 = vpop.f32.mrf.mxu0
    %v246 = vadd.f32 %v184, %v245
    %247 = vdwg.mxu0
    %v248 = vmax.f32 %v244, 0.0
    %v249 = vmax.f32 %v246, 0.0
    %v250 = vpack.c.bf16 %v249, %v248
    %v251 = vld [vmem:[#allocation6] sm:$0xf]
    %v252 = vld [vmem:[#allocation6 + $0x4] sm:$0xf]
    %v253 = vld [vmem:[#allocation6 + $0x8] sm:$0xf]
    %v254 = vld [vmem:[#allocation6 + $0xc] sm:$0xf]
    %v255 = vld [vmem:[#allocation6 + $0x10] sm:$0xf]
    %v256 = vld [vmem:[#allocation6 + $0x14] sm:$0xf]
    %v257 = vld [vmem:[#allocation6 + $0x18] sm:$0xf]
    %v258 = vld [vmem:[#allocation6 + $0x1c] sm:$0xf]
    %v259 = vld [vmem:[#allocation6 + $0x20] sm:$0xf]
    %v260 = vld [vmem:[#allocation6 + $0x24] sm:$0xf]
    %v261 = vld [vmem:[#allocation6 + $0x28] sm:$0xf]
    %v262 = vld [vmem:[#allocation6 + $0x2c] sm:$0xf]
    %v263 = vld [vmem:[#allocation6 + $0x30] sm:$0xf]
    %v264 = vld [vmem:[#allocation6 + $0x34] sm:$0xf]
    %v265 = vld [vmem:[#allocation6 + $0x38] sm:$0xf]
    %v266 = vld [vmem:[#allocation6 + $0x3c] sm:$0xf]
    %v267 = vld [vmem:[%s6] sm:$0x1]
    %v269 = vperm.slane %v267, 0
    %v287 = vunpack.c.l.b16 %v251
    %v288 = vunpack.c.l.b16 %v252
    %v289 = vunpack.c.l.b16 %v253
    %v290 = vunpack.c.l.b16 %v254
    %v291 = vunpack.c.l.b16 %v255
    %v292 = vunpack.c.l.b16 %v256
    %v293 = vunpack.c.l.b16 %v257
    %v294 = vunpack.c.l.b16 %v258
    %v295 = vunpack.c.l.b16 %v259
    %v296 = vunpack.c.l.b16 %v260
    %v297 = vunpack.c.l.b16 %v261
    %v298 = vunpack.c.l.b16 %v262
    %v299 = vunpack.c.l.b16 %v263
    %v300 = vunpack.c.l.b16 %v264
    %v301 = vunpack.c.l.b16 %v265
    %v302 = vunpack.c.l.b16 %v266
    %v303 = vpack.c.b16 %v288, %v287
    %v304 = vpack.c.b16 %v290, %v289
    %v305 = vpack.c.b16 %v292, %v291
    %v306 = vpack.c.b16 %v294, %v293
    %v307 = vpack.c.b16 %v296, %v295
    %v308 = vpack.c.b16 %v298, %v297
    %v309 = vpack.c.b16 %v300, %v299
    %v310 = vpack.c.b16 %v302, %v301
    %319 = vmatpush.bf16.msra.mxu0 %v310
    %320 = vmatpush.bf16.msra.mxu0 %v309
    %321 = vmatpush.bf16.msra.mxu0 %v308
    %322 = vmatpush.bf16.msra.mxu0 %v307
    %323 = vmatpush.bf16.msra.mxu0 %v306
    %324 = vmatpush.bf16.msra.mxu0 %v305
    %325 = vmatpush.bf16.msra.mxu0 %v304
    %326 = vmatpush.bf16.msra.mxu0 %v303
    %327 = vmatmul.bf16.gmra.mxu0 %v250
    %v328 = vpop.f32.mrf.mxu0
    %v329 = vadd.f32 %v269, %v328
    %v330 = vpop.f32.mrf.mxu0
    %v331 = vadd.f32 %v269, %v330
    %332 = vdwg.mxu0
    %333 = vst [vmem:[%s7] sm:$0xff] %v329
    %334 = vst [vmem:[%s7 + $0x8] sm:$0xff] %v331
    // Predicated region
    $region42: #{net_forward.1} parent=1 // pred_check
      _
    $region43: #{net_forward.1} parent=1 // pred_check_branch
      %336 = sbr.rel (0) target = $region45
    $region44: #{net_forward.1} parent=1 // pred_region
      _
    $region45: #{net_forward.1} parent=1 // pred_fallthru
      _
    // Predicated region
    $region46: #{net_forward.1} parent=1 // pred_check
      _
    $region47: #{net_forward.1} parent=1 // pred_check_branch
      %338 = sbr.rel (0) target = $region49
    $region48: #{net_forward.1} parent=1 // pred_region
      _
    $region49: #{net_forward.1} parent=1 // pred_fallthru
      _
    %339 = vsyncpa [#allocation3], 1
    %340 = vsyncpa [#allocation5], 1

</llo_original>
